<compile_context>
chip_gen: v7x
topology: tpu7x:2x2x1
jax: 0.10.0
libtpu: 0.0.40
codegen_flags: <defaults>
</compile_context>

<pallas_src>
import functools
import math

import jax
import jax.numpy as jnp
from jax.experimental import pallas as pl
from jax.experimental.pallas import tpu as pltpu

LANE = 128                                # pad all minor dims to 128 lanes
_RESIDENT_B_BUDGET = 6 * 1024 * 1024      # keep RHS VMEM-resident if <= 6 MiB
_VMEM_LIMIT = 32 * 1024 * 1024            # safe on v5e/v6e (128 MiB) and v7x (64 MiB)


def _round_up(x, m):
    return (x + m - 1) // m * m


def _pick_tile(padded_dim, candidates):
    """Largest candidate tile that divides the (128-multiple) padded dim."""
    for t in candidates:
        if padded_dim >= t and padded_dim % t == 0:
            return t
    return padded_dim


# ----------------------- generic tiled matmul kernel -------------------------
def _matmul_kernel(a_ref, b_ref, o_ref, acc_ref, *, b_resident, tk):
    k = pl.program_id(1)

    @pl.when(k == 0)
    def _():
        acc_ref[...] = jnp.zeros_like(acc_ref)

    if b_resident:
        # Whole B lives in VMEM (DMA'd once: constant block index); slice the
        # current contraction chunk locally instead of re-reading it from HBM.
        start = pl.multiple_of(k * tk, tk)
        b = b_ref[pl.ds(start, tk), :]
    else:
        b = b_ref[...]

    acc_ref[...] += jnp.dot(a_ref[...], b, preferred_element_type=jnp.float32)

    @pl.when(k == pl.num_programs(1) - 1)
    def _():
        o_ref[...] = acc_ref[...].astype(o_ref.dtype)


def _tiled_matmul(a, b, out_dtype):
    """C = a @ b with a:(M,K), b:(K,N); all dims already multiples of 128
    (rows: multiples of 8 suffice).  bf16 MXU operands, f32 accumulation."""
    m, kdim = a.shape
    kdim2, n = b.shape
    assert kdim == kdim2 and m % 8 == 0 and kdim % LANE == 0 and n % LANE == 0

    tm = _pick_tile(m, (512, 256, 128))
    tk = _pick_tile(kdim, (1024, 512, 256, 128))

    b_resident = b.size * b.dtype.itemsize <= _RESIDENT_B_BUDGET
    if b_resident:
        b_spec = pl.BlockSpec((kdim, n), lambda i, k: (0, 0))   # fetched once
        b_bytes = b.size * b.dtype.itemsize
    else:
        b_spec = pl.BlockSpec((tk, n), lambda i, k: (k, 0))     # re-read per row tile
        b_bytes = (m // tm) * b.size * b.dtype.itemsize

    kernel = functools.partial(_matmul_kernel, b_resident=b_resident, tk=tk)

    return pl.pallas_call(
        kernel,
        out_shape=jax.ShapeDtypeStruct((m, n), out_dtype),
        grid_spec=pltpu.PrefetchScalarGridSpec(
            num_scalar_prefetch=0,
            grid=(m // tm, kdim // tk),
            in_specs=[pl.BlockSpec((tm, tk), lambda i, k: (i, k)), b_spec],
            out_specs=pl.BlockSpec((tm, n), lambda i, k: (i, 0)),
            scratch_shapes=[pltpu.VMEM((tm, n), jnp.float32)],
        ),
        compiler_params=pltpu.CompilerParams(
            dimension_semantics=("parallel", "arbitrary"),
            vmem_limit_bytes=_VMEM_LIMIT,
        ),
        cost_estimate=pl.CostEstimate(
            flops=2 * m * kdim * n,
            transcendentals=0,
            bytes_accessed=(a.size * a.dtype.itemsize
                            + b_bytes
                            + m * n * jnp.dtype(out_dtype).itemsize),
        ),
    )(a, b)


# ------------------------------- GCN forward ---------------------------------
@jax.jit
def gcn_forward(x, adj, w1, w2):
    """out = adj @ ((adj @ (x @ W1)) @ W2)   (bias unused in the PyTorch forward)."""
    n, nfeat = x.shape
    nhid = w1.shape[1]
    nout = w2.shape[1]          # derived from W2 (== nhid for this module)

    n_p = _round_up(n, LANE)
    nfeat_p = _round_up(nfeat, LANE)
    nhid_p = _round_up(nhid, LANE)
    nout_p = _round_up(nout, LANE)

    cast = jnp.bfloat16
    # Minimal zero-padding to lane-dense shapes; bf16 for HBM-bound operands,
    # all accumulation stays f32 inside the kernels.
    x_p = jnp.pad(x.astype(cast), ((0, n_p - n), (0, nfeat_p - nfeat)))
    adj_p = jnp.pad(adj.astype(cast), ((0, n_p - n), (0, n_p - n)))
    w1_p = jnp.pad(w1.astype(cast), ((0, nfeat_p - nfeat), (0, nhid_p - nhid)))
    w2_p = jnp.pad(w2.astype(cast), ((0, nhid_p - nhid), (0, nout_p - nout)))

    # Layer 1
    s1 = _tiled_matmul(x_p, w1_p, cast)          # x @ W1
    h1 = _tiled_matmul(adj_p, s1, cast)          # adj @ support1
    # Layer 2
    s2 = _tiled_matmul(h1, w2_p, cast)           # h1 @ W2
    out = _tiled_matmul(adj_p, s2, jnp.float32)  # adj @ support2

    return out[:n, :nout]


def xavier_uniform(key, shape, gain):
    fan_in, fan_out = shape
    bound = gain * math.sqrt(6.0 / (fan_in + fan_out))
    return jax.random.uniform(key, shape, jnp.float32, minval=-bound, maxval=bound)


if __name__ == "__main__":
    # Small, module-consistent shapes: N nodes, nfeat input features, nhid hidden.
    N, NFEAT, NHID = 16, 8, 32

    key = jax.random.PRNGKey(0)
    kx, kadj, kw1, kw2 = jax.random.split(key, 4)

    x = jax.random.normal(kx, (N, NFEAT), jnp.float32)

    # Symmetric, row-normalized adjacency (deterministic).
    a = jax.random.uniform(kadj, (N, N), jnp.float32)
    adj = (a + a.T) * 0.5 + jnp.eye(N, dtype=jnp.float32)
    adj = adj / jnp.sum(adj, axis=-1, keepdims=True)

    gain = math.sqrt(2.0)
    w1 = xavier_uniform(kw1, (NFEAT, NHID), gain)
    w2 = xavier_uniform(kw2, (NHID, NHID), gain)

    out = jax.block_until_ready(gcn_forward(x, adj, w1, w2))
    assert out.shape == (N, NHID)

    # Reference 1: mimic the kernel's bf16 cast points exactly (tight check).
    def q(v):
        return v.astype(jnp.bfloat16).astype(jnp.float32)

    s1_ref = q(q(x) @ q(w1))
    h1_ref = q(q(adj) @ s1_ref)
    s2_ref = q(h1_ref @ q(w2))
    ref_q = q(adj) @ s2_ref
    assert jnp.allclose(out, ref_q, atol=1e-2, rtol=1e-2)

    # Reference 2: full f32 PyTorch-equivalent math (loose check, bf16 inputs).
    ref_f32 = adj @ ((adj @ (x @ w1)) @ w2)
    assert jnp.allclose(out, ref_f32, atol=1e-1, rtol=1e-1)

    print("KERNEL_OK")
</pallas_src>

<mosaic_0001>
module attributes {stable_mosaic.version = 11 : i64} {
  func.func @_matmul_kernel(%arg0: i32, %arg1: i32, %arg2: memref<128x128xbf16, #tpu.memory_space<vmem>>, %arg3: memref<128x128xbf16, #tpu.memory_space<vmem>>, %arg4: memref<128x128xf32, #tpu.memory_space<vmem>>, %arg5: memref<128x128xf32, #tpu.memory_space<vmem>>) attributes {dimension_semantics = [#tpu.dimension_semantics<parallel>, #tpu.dimension_semantics<arbitrary>], iteration_bounds = array<i64: 1, 1>, scalar_prefetch = 0 : i64, scratch_operands = 1 : i64, tpu.core_type = #tpu.core_type<tc>, window_params = [{transform_indices = @transform_0, window_bounds = array<i64: 128, 128>}, {pipeline_mode = #tpu.pipeline_mode<synchronous>, transform_indices = @transform_1, window_bounds = array<i64: 128, 128>}, {transform_indices = @transform_2, window_bounds = array<i64: 128, 128>}]} {
    %c0_i32 = arith.constant 0 : i32
    %0 = arith.cmpi eq, %arg1, %c0_i32 : i32
    %1 = arith.extui %0 : i1 to i32
    %c0_i32_0 = arith.constant 0 : i32
    %2 = arith.cmpi ne, %1, %c0_i32_0 : i32
    scf.if %2 {
      %cst_9 = arith.constant 0.000000e+00 : f32
      %15 = vector.broadcast %cst_9 : f32 to vector<128x128xf32>
      %c0_10 = arith.constant 0 : index
      %c0_11 = arith.constant 0 : index
      %16 = vector.load %arg5[%c0_10, %c0_11] : memref<128x128xf32, #tpu.memory_space<vmem>>, vector<128x128xf32>
      tpu.vector_store %arg5[%c0_10, %c0_11], %15 {strides = array<i32>} : memref<128x128xf32, #tpu.memory_space<vmem>>, vector<128x128xf32>,
    } else {
    }
    %c128_i32 = arith.constant 128 : i32
    %3 = arith.muli %arg1, %c128_i32 : i32
    %4 = tpu.assume_multiple %3, 128 : i32
    %5 = arith.index_cast %4 : i32 to index
    %c0 = arith.constant 0 : index
    %6 = vector.load %arg3[%5, %c0] : memref<128x128xbf16, #tpu.memory_space<vmem>>, vector<128x128xbf16>
    %c0_1 = arith.constant 0 : index
    %c0_2 = arith.constant 0 : index
    %7 = vector.load %arg5[%c0_1, %c0_2] : memref<128x128xf32, #tpu.memory_space<vmem>>, vector<128x128xf32>
    %c0_3 = arith.constant 0 : index
    %c0_4 = arith.constant 0 : index
    %8 = vector.load %arg2[%c0_3, %c0_4] : memref<128x128xbf16, #tpu.memory_space<vmem>>, vector<128x128xbf16>
    %cst = arith.constant dense<0.000000e+00> : vector<128x128xf32>
    %9 = tpu.matmul %8, %6, %cst {dimension_numbers = #tpu.dot_dimension_numbers<[1], [0], [0], [1], [0, 0, 1, 1], [], []>} : vector<128x128xbf16>, vector<128x128xbf16>, vector<128x128xf32> -> vector<128x128xf32>
    %10 = arith.addf %7, %9 : vector<128x128xf32>
    %c0_5 = arith.constant 0 : index
    %c0_6 = arith.constant 0 : index
    %11 = vector.load %arg5[%c0_5, %c0_6] : memref<128x128xf32, #tpu.memory_space<vmem>>, vector<128x128xf32>
    tpu.vector_store %arg5[%c0_5, %c0_6], %10 {strides = array<i32>} : memref<128x128xf32, #tpu.memory_space<vmem>>, vector<128x128xf32>,
    %c0_i32_7 = arith.constant 0 : i32
    %12 = arith.cmpi eq, %arg1, %c0_i32_7 : i32
    %13 = arith.extui %12 : i1 to i32
    %c0_i32_8 = arith.constant 0 : i32
    %14 = arith.cmpi ne, %13, %c0_i32_8 : i32
    scf.if %14 {
      %c0_9 = arith.constant 0 : index
      %c0_10 = arith.constant 0 : index
      %15 = vector.load %arg5[%c0_9, %c0_10] : memref<128x128xf32, #tpu.memory_space<vmem>>, vector<128x128xf32>
      %c0_11 = arith.constant 0 : index
      %c0_12 = arith.constant 0 : index
      %16 = vector.load %arg4[%c0_11, %c0_12] : memref<128x128xf32, #tpu.memory_space<vmem>>, vector<128x128xf32>
      tpu.vector_store %arg4[%c0_11, %c0_12], %15 {strides = array<i32>} : memref<128x128xf32, #tpu.memory_space<vmem>>, vector<128x128xf32>,
    } else {
    }
    return
  }
  func.func @transform_0(%arg0: i32, %arg1: i32) -> (i32, i32) {
    %c0_i32 = arith.constant 0 : i32
    return %arg0, %arg1 : i32, i32
  }
  func.func @transform_1(%arg0: i32, %arg1: i32) -> (i32, i32) {
    %c0_i32 = arith.constant 0 : i32
    %c0_i32_0 = arith.constant 0 : i32
    %c0_i32_1 = arith.constant 0 : i32
    return %c0_i32, %c0_i32_0 : i32, i32
  }
  func.func @transform_2(%arg0: i32, %arg1: i32) -> (i32, i32) {
    %c0_i32 = arith.constant 0 : i32
    %c0_i32_0 = arith.constant 0 : i32
    return %arg0, %c0_i32 : i32, i32
  }
}

module attributes {stable_mosaic.version = 11 : i64} {
  func.func @_matmul_kernel(%arg0: i32, %arg1: i32, %arg2: memref<128x128xbf16, #tpu.memory_space<vmem>>, %arg3: memref<128x128xbf16, #tpu.memory_space<vmem>>, %arg4: memref<128x128xbf16, #tpu.memory_space<vmem>>, %arg5: memref<128x128xf32, #tpu.memory_space<vmem>>) attributes {dimension_semantics = [#tpu.dimension_semantics<parallel>, #tpu.dimension_semantics<arbitrary>], iteration_bounds = array<i64: 1, 1>, scalar_prefetch = 0 : i64, scratch_operands = 1 : i64, tpu.core_type = #tpu.core_type<tc>, window_params = [{transform_indices = @transform_0, window_bounds = array<i64: 128, 128>}, {pipeline_mode = #tpu.pipeline_mode<synchronous>, transform_indices = @transform_1, window_bounds = array<i64: 128, 128>}, {transform_indices = @transform_2, window_bounds = array<i64: 128, 128>}]} {
    %c0_i32 = arith.constant 0 : i32
    %0 = arith.cmpi eq, %arg1, %c0_i32 : i32
    %1 = arith.extui %0 : i1 to i32
    %c0_i32_0 = arith.constant 0 : i32
    %2 = arith.cmpi ne, %1, %c0_i32_0 : i32
    scf.if %2 {
      %cst_9 = arith.constant 0.000000e+00 : f32
      %15 = vector.broadcast %cst_9 : f32 to vector<128x128xf32>
      %c0_10 = arith.constant 0 : index
      %c0_11 = arith.constant 0 : index
      %16 = vector.load %arg5[%c0_10, %c0_11] : memref<128x128xf32, #tpu.memory_space<vmem>>, vector<128x128xf32>
      tpu.vector_store %arg5[%c0_10, %c0_11], %15 {strides = array<i32>} : memref<128x128xf32, #tpu.memory_space<vmem>>, vector<128x128xf32>,
    } else {
    }
    %c128_i32 = arith.constant 128 : i32
    %3 = arith.muli %arg1, %c128_i32 : i32
    %4 = tpu.assume_multiple %3, 128 : i32
    %5 = arith.index_cast %4 : i32 to index
    %c0 = arith.constant 0 : index
    %6 = vector.load %arg3[%5, %c0] : memref<128x128xbf16, #tpu.memory_space<vmem>>, vector<128x128xbf16>
    %c0_1 = arith.constant 0 : index
    %c0_2 = arith.constant 0 : index
    %7 = vector.load %arg5[%c0_1, %c0_2] : memref<128x128xf32, #tpu.memory_space<vmem>>, vector<128x128xf32>
    %c0_3 = arith.constant 0 : index
    %c0_4 = arith.constant 0 : index
    %8 = vector.load %arg2[%c0_3, %c0_4] : memref<128x128xbf16, #tpu.memory_space<vmem>>, vector<128x128xbf16>
    %cst = arith.constant dense<0.000000e+00> : vector<128x128xf32>
    %9 = tpu.matmul %8, %6, %cst {dimension_numbers = #tpu.dot_dimension_numbers<[1], [0], [0], [1], [0, 0, 1, 1], [], []>} : vector<128x128xbf16>, vector<128x128xbf16>, vector<128x128xf32> -> vector<128x128xf32>
    %10 = arith.addf %7, %9 : vector<128x128xf32>
    %c0_5 = arith.constant 0 : index
    %c0_6 = arith.constant 0 : index
    %11 = vector.load %arg5[%c0_5, %c0_6] : memref<128x128xf32, #tpu.memory_space<vmem>>, vector<128x128xf32>
    tpu.vector_store %arg5[%c0_5, %c0_6], %10 {strides = array<i32>} : memref<128x128xf32, #tpu.memory_space<vmem>>, vector<128x128xf32>,
    %c0_i32_7 = arith.constant 0 : i32
    %12 = arith.cmpi eq, %arg1, %c0_i32_7 : i32
    %13 = arith.extui %12 : i1 to i32
    %c0_i32_8 = arith.constant 0 : i32
    %14 = arith.cmpi ne, %13, %c0_i32_8 : i32
    scf.if %14 {
      %c0_9 = arith.constant 0 : index
      %c0_10 = arith.constant 0 : index
      %15 = vector.load %arg5[%c0_9, %c0_10] : memref<128x128xf32, #tpu.memory_space<vmem>>, vector<128x128xf32>
      %16 = arith.truncf %15 : vector<128x128xf32> to vector<128x128xbf16>
      %c0_11 = arith.constant 0 : index
      %c0_12 = arith.constant 0 : index
      %17 = vector.load %arg4[%c0_11, %c0_12] : memref<128x128xbf16, #tpu.memory_space<vmem>>, vector<128x128xbf16>
      tpu.vector_store %arg4[%c0_11, %c0_12], %16 {strides = array<i32>} : memref<128x128xbf16, #tpu.memory_space<vmem>>, vector<128x128xbf16>,
    } else {
    }
    return
  }
  func.func @transform_0(%arg0: i32, %arg1: i32) -> (i32, i32) {
    %c0_i32 = arith.constant 0 : i32
    return %arg0, %arg1 : i32, i32
  }
  func.func @transform_1(%arg0: i32, %arg1: i32) -> (i32, i32) {
    %c0_i32 = arith.constant 0 : i32
    %c0_i32_0 = arith.constant 0 : i32
    %c0_i32_1 = arith.constant 0 : i32
    return %c0_i32, %c0_i32_0 : i32, i32
  }
  func.func @transform_2(%arg0: i32, %arg1: i32) -> (i32, i32) {
    %c0_i32 = arith.constant 0 : i32
    %c0_i32_0 = arith.constant 0 : i32
    return %arg0, %c0_i32 : i32, i32
  }
}

</mosaic_0001>

<llo_original>
// kernel: gcn_forward.7
$region0: #{gcn_forward.7}
  #allocation0 [shape = 'u32[]', space=smem, size = 0x4, offset = 0x4, fixed_abs, tag = 'smem constant byte address 0x4 - core index']
  #allocation1 [shape = 'u32[144,128]{1,0:T(1,128)}', space=vmem, size = 0x12000, scoped, tag = 'internal scratch']
  #allocation2 [shape = 'f32[128,128]{1,0:T(8,128)}', space=vmem, size = 0x10000, scoped, tag = 'scratch operand']
  %s0 = inlined_call_operand.vmem [shape: bf16[128,128], index: 0, kind: input, shape index: {}]
  %s1 = inlined_call_operand.vmem [shape: bf16[128,128], index: 1, kind: input, shape index: {}]
  %s2 = inlined_call_operand.vmem [shape: f32[128,128], index: 2, kind: output, shape index: {}]
  %s3 = sld [smem:[#allocation0]]
  $region26: #{gcn_forward.7} parent=0
    _
  %s5 = ssub.s32 1, %s3
  %s6 = scalar_select 0, %s5, %s3
  // Predicated region
  $region2: #{gcn_forward.7} parent=0 // pred_check
    _
  $region3: #{gcn_forward.7} parent=0 // pred_check_branch
    %8 = sbr.rel (0) target = $region5
  $region4: #{gcn_forward.7} parent=0 // pred_region
    _
  $region5: #{gcn_forward.7} parent=0 // pred_fallthru
    _
  // Predicated region
  $region6: #{gcn_forward.7} parent=0 // pred_check
    _
  $region7: #{gcn_forward.7} parent=0 // pred_check_branch
    %10 = sbr.rel (0) target = $region9
  $region8: #{gcn_forward.7} parent=0 // pred_region
    _
  $region9: #{gcn_forward.7} parent=0 // pred_fallthru
    _
  %p12 = scmp.eq.s32.totalorder 0, 0
  // Predicated region
  $region10: #{gcn_forward.7} parent=0 // pred_check
    %p13 = pneg %p12
  $region11: #{gcn_forward.7} parent=0 // pred_check_branch
    %15 = sbr.rel (%p13) target = $region13
  $region12: #{gcn_forward.7} parent=0 // pred_region
    %16 = vst [vmem:[#allocation2] sm:$0xff] 0.0
    %17 = vst [vmem:[#allocation2 + $0x8] sm:$0xff] 0.0
    %18 = vst [vmem:[#allocation2 + $0x10] sm:$0xff] 0.0
    %19 = vst [vmem:[#allocation2 + $0x18] sm:$0xff] 0.0
    %20 = vst [vmem:[#allocation2 + $0x20] sm:$0xff] 0.0
    %21 = vst [vmem:[#allocation2 + $0x28] sm:$0xff] 0.0
    %22 = vst [vmem:[#allocation2 + $0x30] sm:$0xff] 0.0
    %23 = vst [vmem:[#allocation2 + $0x38] sm:$0xff] 0.0
    %24 = vst [vmem:[#allocation2 + $0x40] sm:$0xff] 0.0
    %25 = vst [vmem:[#allocation2 + $0x48] sm:$0xff] 0.0
    %26 = vst [vmem:[#allocation2 + $0x50] sm:$0xff] 0.0
    %27 = vst [vmem:[#allocation2 + $0x58] sm:$0xff] 0.0
    %28 = vst [vmem:[#allocation2 + $0x60] sm:$0xff] 0.0
    %29 = vst [vmem:[#allocation2 + $0x68] sm:$0xff] 0.0
    %30 = vst [vmem:[#allocation2 + $0x70] sm:$0xff] 0.0
    %31 = vst [vmem:[#allocation2 + $0x78] sm:$0xff] 0.0
  $region13: #{gcn_forward.7} parent=0 // pred_fallthru
    _
  %s32 = smul.u32 0, 128
  %s33 = sshra.s32 %s32, 3
  %s34 = sand.u32 %s32, 7
  %s35 = smul.addr %s33, 4
  %s36 = scalar_lea.vmem %s1, %s35
  %v37 = vld [vmem:[%s36] sm:$0xf]
  %v38 = vld [vmem:[%s36 + $0x4] sm:$0xf]
  %v39 = vld [vmem:[%s36 + $0x8] sm:$0xf]
  %v40 = vld [vmem:[%s36 + $0xc] sm:$0xf]
  %v41 = vld [vmem:[%s36 + $0x10] sm:$0xf]
  %v42 = vld [vmem:[%s36 + $0x14] sm:$0xf]
  %v43 = vld [vmem:[%s36 + $0x18] sm:$0xf]
  %v44 = vld [vmem:[%s36 + $0x1c] sm:$0xf]
  %v45 = vld [vmem:[%s36 + $0x20] sm:$0xf]
  %v46 = vld [vmem:[%s36 + $0x24] sm:$0xf]
  %v47 = vld [vmem:[%s36 + $0x28] sm:$0xf]
  %v48 = vld [vmem:[%s36 + $0x2c] sm:$0xf]
  %v49 = vld [vmem:[%s36 + $0x30] sm:$0xf]
  %v50 = vld [vmem:[%s36 + $0x34] sm:$0xf]
  %v51 = vld [vmem:[%s36 + $0x38] sm:$0xf]
  %v52 = vld [vmem:[%s36 + $0x3c] sm:$0xf]
  %v53 = vld [vmem:[#allocation2] sm:$0xff]
  %v54 = vld [vmem:[#allocation2 + $0x8] sm:$0xff]
  %v55 = vld [vmem:[#allocation2 + $0x10] sm:$0xff]
  %v56 = vld [vmem:[#allocation2 + $0x18] sm:$0xff]
  %v57 = vld [vmem:[#allocation2 + $0x20] sm:$0xff]
  %v58 = vld [vmem:[#allocation2 + $0x28] sm:$0xff]
  %v59 = vld [vmem:[#allocation2 + $0x30] sm:$0xff]
  %v60 = vld [vmem:[#allocation2 + $0x38] sm:$0xff]
  %v61 = vld [vmem:[#allocation2 + $0x40] sm:$0xff]
  %v62 = vld [vmem:[#allocation2 + $0x48] sm:$0xff]
  %v63 = vld [vmem:[#allocation2 + $0x50] sm:$0xff]
  %v64 = vld [vmem:[#allocation2 + $0x58] sm:$0xff]
  %v65 = vld [vmem:[#allocation2 + $0x60] sm:$0xff]
  %v66 = vld [vmem:[#allocation2 + $0x68] sm:$0xff]
  %v67 = vld [vmem:[#allocation2 + $0x70] sm:$0xff]
  %v68 = vld [vmem:[#allocation2 + $0x78] sm:$0xff]
  %v69 = vld [vmem:[%s0] sm:$0xf]
  %v70 = vld [vmem:[%s0 + $0x4] sm:$0xf]
  %v71 = vld [vmem:[%s0 + $0x8] sm:$0xf]
  %v72 = vld [vmem:[%s0 + $0xc] sm:$0xf]
  %v73 = vld [vmem:[%s0 + $0x10] sm:$0xf]
  %v74 = vld [vmem:[%s0 + $0x14] sm:$0xf]
  %v75 = vld [vmem:[%s0 + $0x18] sm:$0xf]
  %v76 = vld [vmem:[%s0 + $0x1c] sm:$0xf]
  %v77 = vld [vmem:[%s0 + $0x20] sm:$0xf]
  %v78 = vld [vmem:[%s0 + $0x24] sm:$0xf]
  %v79 = vld [vmem:[%s0 + $0x28] sm:$0xf]
  %v80 = vld [vmem:[%s0 + $0x2c] sm:$0xf]
  %v81 = vld [vmem:[%s0 + $0x30] sm:$0xf]
  %v82 = vld [vmem:[%s0 + $0x34] sm:$0xf]
  %v83 = vld [vmem:[%s0 + $0x38] sm:$0xf]
  %v84 = vld [vmem:[%s0 + $0x3c] sm:$0xf]
  %v101 = vunpack.c.l.b16 %v69
  %v102 = vunpack.c.l.b16 %v70
  %v103 = vunpack.c.l.b16 %v71
  %v104 = vunpack.c.l.b16 %v72
  %v105 = vunpack.c.l.b16 %v73
  %v106 = vunpack.c.l.b16 %v74
  %v107 = vunpack.c.l.b16 %v75
  %v108 = vunpack.c.l.b16 %v76
  %v109 = vunpack.c.l.b16 %v77
  %v110 = vunpack.c.l.b16 %v78
  %v111 = vunpack.c.l.b16 %v79
  %v112 = vunpack.c.l.b16 %v80
  %v113 = vunpack.c.l.b16 %v81
  %v114 = vunpack.c.l.b16 %v82
  %v115 = vunpack.c.l.b16 %v83
  %v116 = vunpack.c.l.b16 %v84
  %v117 = vpack.c.b16 %v102, %v101
  %v118 = vpack.c.b16 %v104, %v103
  %v119 = vpack.c.b16 %v106, %v105
  %v120 = vpack.c.b16 %v108, %v107
  %v121 = vpack.c.b16 %v110, %v109
  %v122 = vpack.c.b16 %v112, %v111
  %v123 = vpack.c.b16 %v114, %v113
  %v124 = vpack.c.b16 %v116, %v115
  %v149 = vunpack.c.l.b16 %v37
  %v150 = vunpack.c.l.b16 %v38
  %v151 = vunpack.c.l.b16 %v39
  %v152 = vunpack.c.l.b16 %v40
  %v153 = vunpack.c.l.b16 %v41
  %v154 = vunpack.c.l.b16 %v42
  %v155 = vunpack.c.l.b16 %v43
  %v156 = vunpack.c.l.b16 %v44
  %v157 = vunpack.c.l.b16 %v45
  %v158 = vunpack.c.l.b16 %v46
  %v159 = vunpack.c.l.b16 %v47
  %v160 = vunpack.c.l.b16 %v48
  %v161 = vunpack.c.l.b16 %v49
  %v162 = vunpack.c.l.b16 %v50
  %v163 = vunpack.c.l.b16 %v51
  %v164 = vunpack.c.l.b16 %v52
  %v165 = vpack.c.b16 %v150, %v149
  %v166 = vpack.c.b16 %v152, %v151
  %v167 = vpack.c.b16 %v154, %v153
  %v168 = vpack.c.b16 %v156, %v155
  %v169 = vpack.c.b16 %v158, %v157
  %v170 = vpack.c.b16 %v160, %v159
  %v171 = vpack.c.b16 %v162, %v161
  %v172 = vpack.c.b16 %v164, %v163
  %181 = vmatprep.subr.bf16.mxu0 0
  %182 = vmatpush1.bf16.msra.mxu0 %v165
  %183 = vmatprep.subr.bf16.mxu0 0
  %184 = vmatpush1.bf16.msra.mxu0 %v166
  %185 = vmatprep.subr.bf16.mxu0 0
  %186 = vmatpush1.bf16.msra.mxu0 %v167
  %187 = vmatprep.subr.bf16.mxu0 0
  %188 = vmatpush1.bf16.msra.mxu0 %v168
  %189 = vmatprep.subr.bf16.mxu0 0
  %190 = vmatpush1.bf16.msra.mxu0 %v169
  %191 = vmatprep.subr.bf16.mxu0 0
  %192 = vmatpush1.bf16.msra.mxu0 %v170
  %193 = vmatprep.subr.bf16.mxu0 0
  %194 = vmatpush1.bf16.msra.mxu0 %v171
  %195 = vmatprep.subr.bf16.mxu0 0
  %196 = vmatpush1.bf16.msra.mxu0 %v172
  %197 = vmatprep.subr.bf16.mxu0 0
  %198 = vmatpush1.bf16.msra.mxu0 0
  %199 = vmatprep.subr.bf16.mxu0 0
  %200 = vmatpush1.bf16.msra.mxu0 0
  %201 = vmatprep.subr.bf16.mxu0 0
  %202 = vmatpush1.bf16.msra.mxu0 0
  %203 = vmatprep.subr.bf16.mxu0 0
  %204 = vmatpush1.bf16.msra.mxu0 0
  %205 = vmatprep.subr.bf16.mxu0 0
  %206 = vmatpush1.bf16.msra.mxu0 0
  %207 = vmatprep.subr.bf16.mxu0 0
  %208 = vmatpush1.bf16.msra.mxu0 0
  %209 = vmatprep.subr.bf16.mxu0 0
  %210 = vmatpush1.bf16.msra.mxu0 0
  %211 = vmatprep.subr.bf16.mxu0 0
  %212 = vmatpush1.bf16.msra.mxu0 0
  %213 = vmatprep.mubr.bf16.mxu0 0
  %214 = vmatmul.mubr.bf16.gmra.mrb[0].mxu0 %v117
  %v215 = vpop.f32.mrb[0].mxu0
  %v216 = vadd.f32 0.0, %v215
  %v217 = vpop.f32.mrb[0].mxu0
  %v218 = vpop.f32.mrb[0].mxu0
  %v219 = vadd.f32 0.0, %v218
  %v220 = vpop.f32.mrb[0].mxu0
  %221 = vmatprep.mubr.bf16.mxu0 0
  %222 = vmatmul.mubr.bf16.gmra.mrb[0].mxu0 %v118
  %v223 = vpop.f32.mrb[0].mxu0
  %v224 = vadd.f32 0.0, %v223
  %v225 = vpop.f32.mrb[0].mxu0
  %v226 = vpop.f32.mrb[0].mxu0
  %v227 = vadd.f32 0.0, %v226
  %v228 = vpop.f32.mrb[0].mxu0
  %229 = vmatprep.mubr.bf16.mxu0 0
  %230 = vmatmul.mubr.bf16.gmra.mrb[0].mxu0 %v119
  %v231 = vpop.f32.mrb[0].mxu0
  %v232 = vadd.f32 0.0, %v231
  %v233 = vpop.f32.mrb[0].mxu0
  %v234 = vpop.f32.mrb[0].mxu0
  %v235 = vadd.f32 0.0, %v234
  %v236 = vpop.f32.mrb[0].mxu0
  %237 = vmatprep.mubr.bf16.mxu0 0
  %238 = vmatmul.mubr.bf16.gmra.mrb[0].mxu0 %v120
  %v239 = vpop.f32.mrb[0].mxu0
  %v240 = vadd.f32 0.0, %v239
  %v241 = vpop.f32.mrb[0].mxu0
  %v242 = vpop.f32.mrb[0].mxu0
  %v243 = vadd.f32 0.0, %v242
  %v244 = vpop.f32.mrb[0].mxu0
  %245 = vmatprep.mubr.bf16.mxu0 0
  %246 = vmatmul.mubr.bf16.gmra.mrb[0].mxu0 %v121
  %v247 = vpop.f32.mrb[0].mxu0
  %v248 = vadd.f32 0.0, %v247
  %v249 = vpop.f32.mrb[0].mxu0
  %v250 = vpop.f32.mrb[0].mxu0
  %v251 = vadd.f32 0.0, %v250
  %v252 = vpop.f32.mrb[0].mxu0
  %253 = vmatprep.mubr.bf16.mxu0 0
  %254 = vmatmul.mubr.bf16.gmra.mrb[0].mxu0 %v122
  %v255 = vpop.f32.mrb[0].mxu0
  %v256 = vadd.f32 0.0, %v255
  %v257 = vpop.f32.mrb[0].mxu0
  %v258 = vpop.f32.mrb[0].mxu0
  %v259 = vadd.f32 0.0, %v258
  %v260 = vpop.f32.mrb[0].mxu0
  %261 = vmatprep.mubr.bf16.mxu0 0
  %262 = vmatmul.mubr.bf16.gmra.mrb[0].mxu0 %v123
  %v263 = vpop.f32.mrb[0].mxu0
  %v264 = vadd.f32 0.0, %v263
  %v265 = vpop.f32.mrb[0].mxu0
  %v266 = vpop.f32.mrb[0].mxu0
  %v267 = vadd.f32 0.0, %v266
  %v268 = vpop.f32.mrb[0].mxu0
  %269 = vmatprep.mubr.bf16.mxu0 0
  %270 = vmatmul.mubr.bf16.gmra.mrb[0].mxu0 %v124
  %v271 = vpop.f32.mrb[0].mxu0
  %v272 = vadd.f32 0.0, %v271
  %v273 = vpop.f32.mrb[0].mxu0
  %v274 = vpop.f32.mrb[0].mxu0
  %v275 = vadd.f32 0.0, %v274
  %v276 = vpop.f32.mrb[0].mxu0
  %277 = vdwg.mxu0
  %v278 = vadd.f32 %v53, %v216
  %v279 = vadd.f32 %v54, %v219
  %v280 = vadd.f32 %v55, %v224
  %v281 = vadd.f32 %v56, %v227
  %v282 = vadd.f32 %v57, %v232
  %v283 = vadd.f32 %v58, %v235
  %v284 = vadd.f32 %v59, %v240
  %v285 = vadd.f32 %v60, %v243
  %v286 = vadd.f32 %v61, %v248
  %v287 = vadd.f32 %v62, %v251
  %v288 = vadd.f32 %v63, %v256
  %v289 = vadd.f32 %v64, %v259
  %v290 = vadd.f32 %v65, %v264
  %v291 = vadd.f32 %v66, %v267
  %v292 = vadd.f32 %v67, %v272
  %v293 = vadd.f32 %v68, %v275
  %294 = vst [vmem:[#allocation2] sm:$0xff] %v278
  %295 = vst [vmem:[#allocation2 + $0x8] sm:$0xff] %v279
  %296 = vst [vmem:[#allocation2 + $0x10] sm:$0xff] %v280
  %297 = vst [vmem:[#allocation2 + $0x18] sm:$0xff] %v281
  %298 = vst [vmem:[#allocation2 + $0x20] sm:$0xff] %v282
  %299 = vst [vmem:[#allocation2 + $0x28] sm:$0xff] %v283
  %300 = vst [vmem:[#allocation2 + $0x30] sm:$0xff] %v284
  %301 = vst [vmem:[#allocation2 + $0x38] sm:$0xff] %v285
  %302 = vst [vmem:[#allocation2 + $0x40] sm:$0xff] %v286
  %303 = vst [vmem:[#allocation2 + $0x48] sm:$0xff] %v287
  %304 = vst [vmem:[#allocation2 + $0x50] sm:$0xff] %v288
  %305 = vst [vmem:[#allocation2 + $0x58] sm:$0xff] %v289
  %306 = vst [vmem:[#allocation2 + $0x60] sm:$0xff] %v290
  %307 = vst [vmem:[#allocation2 + $0x68] sm:$0xff] %v291
  %308 = vst [vmem:[#allocation2 + $0x70] sm:$0xff] %v292
  %309 = vst [vmem:[#allocation2 + $0x78] sm:$0xff] %v293
  // Predicated region
  $region14: #{gcn_forward.7} parent=0 // pred_check
    %p310 = pneg %p12
  $region15: #{gcn_forward.7} parent=0 // pred_check_branch
    %312 = sbr.rel (%p310) target = $region17
  $region16: #{gcn_forward.7} parent=0 // pred_region
    %v313 = vld [vmem:[#allocation2] sm:$0xff]
    %v314 = vld [vmem:[#allocation2 + $0x8] sm:$0xff]
    %v315 = vld [vmem:[#allocation2 + $0x10] sm:$0xff]
    %v316 = vld [vmem:[#allocation2 + $0x18] sm:$0xff]
    %v317 = vld [vmem:[#allocation2 + $0x20] sm:$0xff]
    %v318 = vld [vmem:[#allocation2 + $0x28] sm:$0xff]
    %v319 = vld [vmem:[#allocation2 + $0x30] sm:$0xff]
    %v320 = vld [vmem:[#allocation2 + $0x38] sm:$0xff]
    %v321 = vld [vmem:[#allocation2 + $0x40] sm:$0xff]
    %v322 = vld [vmem:[#allocation2 + $0x48] sm:$0xff]
    %v323 = vld [vmem:[#allocation2 + $0x50] sm:$0xff]
    %v324 = vld [vmem:[#allocation2 + $0x58] sm:$0xff]
    %v325 = vld [vmem:[#allocation2 + $0x60] sm:$0xff]
    %v326 = vld [vmem:[#allocation2 + $0x68] sm:$0xff]
    %v327 = vld [vmem:[#allocation2 + $0x70] sm:$0xff]
    %v328 = vld [vmem:[#allocation2 + $0x78] sm:$0xff]
    %329 = vst [vmem:[%s2] sm:$0xff] %v313
    %330 = vst [vmem:[%s2 + $0x8] sm:$0xff] %v314
    %331 = vst [vmem:[%s2 + $0x10] sm:$0xff] %v315
    %332 = vst [vmem:[%s2 + $0x18] sm:$0xff] %v316
    %333 = vst [vmem:[%s2 + $0x20] sm:$0xff] %v317
    %334 = vst [vmem:[%s2 + $0x28] sm:$0xff] %v318
    %335 = vst [vmem:[%s2 + $0x30] sm:$0xff] %v319
    %336 = vst [vmem:[%s2 + $0x38] sm:$0xff] %v320
    %337 = vst [vmem:[%s2 + $0x40] sm:$0xff] %v321
    %338 = vst [vmem:[%s2 + $0x48] sm:$0xff] %v322
    %339 = vst [vmem:[%s2 + $0x50] sm:$0xff] %v323
    %340 = vst [vmem:[%s2 + $0x58] sm:$0xff] %v324
    %341 = vst [vmem:[%s2 + $0x60] sm:$0xff] %v325
    %342 = vst [vmem:[%s2 + $0x68] sm:$0xff] %v326
    %343 = vst [vmem:[%s2 + $0x70] sm:$0xff] %v327
    %344 = vst [vmem:[%s2 + $0x78] sm:$0xff] %v328
  $region17: #{gcn_forward.7} parent=0 // pred_fallthru
    _
  // Predicated region
  $region18: #{gcn_forward.7} parent=0 // pred_check
    _
  $region19: #{gcn_forward.7} parent=0 // pred_check_branch
    %346 = sbr.rel (0) target = $region21
  $region20: #{gcn_forward.7} parent=0 // pred_region
    _
  $region21: #{gcn_forward.7} parent=0 // pred_fallthru
    _
  // Predicated region
  $region22: #{gcn_forward.7} parent=0 // pred_check
    _
  $region23: #{gcn_forward.7} parent=0 // pred_check_branch
    %348 = sbr.rel (0) target = $region25
  $region24: #{gcn_forward.7} parent=0 // pred_region
    _
  $region25: #{gcn_forward.7} parent=0 // pred_fallthru
    _

// kernel: gcn_forward.4
$region0: #{gcn_forward.4}
  #allocation0 [shape = 'u32[]', space=smem, size = 0x4, offset = 0x4, fixed_abs, tag = 'smem constant byte address 0x4 - core index']
  #allocation1 [shape = 'u32[144,128]{1,0:T(1,128)}', space=vmem, size = 0x12000, scoped, tag = 'internal scratch']
  #allocation2 [shape = 'f32[128,128]{1,0:T(8,128)}', space=vmem, size = 0x10000, scoped, tag = 'scratch operand']
  %s0 = inlined_call_operand.vmem [shape: bf16[128,128], index: 0, kind: input, shape index: {}]
  %s1 = inlined_call_operand.vmem [shape: bf16[128,128], index: 1, kind: input, shape index: {}]
  %s2 = inlined_call_operand.vmem [shape: bf16[128,128], index: 2, kind: output, shape index: {}]
  %s3 = sld [smem:[#allocation0]]
  $region26: #{gcn_forward.4} parent=0
    _
  %s5 = ssub.s32 1, %s3
  %s6 = scalar_select 0, %s5, %s3
  // Predicated region
  $region2: #{gcn_forward.4} parent=0 // pred_check
    _
  $region3: #{gcn_forward.4} parent=0 // pred_check_branch
    %8 = sbr.rel (0) target = $region5
  $region4: #{gcn_forward.4} parent=0 // pred_region
    _
  $region5: #{gcn_forward.4} parent=0 // pred_fallthru
    _
  // Predicated region
  $region6: #{gcn_forward.4} parent=0 // pred_check
    _
  $region7: #{gcn_forward.4} parent=0 // pred_check_branch
    %10 = sbr.rel (0) target = $region9
  $region8: #{gcn_forward.4} parent=0 // pred_region
    _
  $region9: #{gcn_forward.4} parent=0 // pred_fallthru
    _
  %p12 = scmp.eq.s32.totalorder 0, 0
  // Predicated region
  $region10: #{gcn_forward.4} parent=0 // pred_check
    %p13 = pneg %p12
  $region11: #{gcn_forward.4} parent=0 // pred_check_branch
    %15 = sbr.rel (%p13) target = $region13
  $region12: #{gcn_forward.4} parent=0 // pred_region
    %16 = vst [vmem:[#allocation2] sm:$0xff] 0.0
    %17 = vst [vmem:[#allocation2 + $0x8] sm:$0xff] 0.0
    %18 = vst [vmem:[#allocation2 + $0x10] sm:$0xff] 0.0
    %19 = vst [vmem:[#allocation2 + $0x18] sm:$0xff] 0.0
    %20 = vst [vmem:[#allocation2 + $0x20] sm:$0xff] 0.0
    %21 = vst [vmem:[#allocation2 + $0x28] sm:$0xff] 0.0
    %22 = vst [vmem:[#allocation2 + $0x30] sm:$0xff] 0.0
    %23 = vst [vmem:[#allocation2 + $0x38] sm:$0xff] 0.0
    %24 = vst [vmem:[#allocation2 + $0x40] sm:$0xff] 0.0
    %25 = vst [vmem:[#allocation2 + $0x48] sm:$0xff] 0.0
    %26 = vst [vmem:[#allocation2 + $0x50] sm:$0xff] 0.0
    %27 = vst [vmem:[#allocation2 + $0x58] sm:$0xff] 0.0
    %28 = vst [vmem:[#allocation2 + $0x60] sm:$0xff] 0.0
    %29 = vst [vmem:[#allocation2 + $0x68] sm:$0xff] 0.0
    %30 = vst [vmem:[#allocation2 + $0x70] sm:$0xff] 0.0
    %31 = vst [vmem:[#allocation2 + $0x78] sm:$0xff] 0.0
  $region13: #{gcn_forward.4} parent=0 // pred_fallthru
    _
  %s32 = smul.u32 0, 128
  %s33 = sshra.s32 %s32, 3
  %s34 = sand.u32 %s32, 7
  %s35 = smul.addr %s33, 4
  %s36 = scalar_lea.vmem %s1, %s35
  %v37 = vld [vmem:[%s36] sm:$0xf]
  %v38 = vld [vmem:[%s36 + $0x4] sm:$0xf]
  %v39 = vld [vmem:[%s36 + $0x8] sm:$0xf]
  %v40 = vld [vmem:[%s36 + $0xc] sm:$0xf]
  %v41 = vld [vmem:[%s36 + $0x10] sm:$0xf]
  %v42 = vld [vmem:[%s36 + $0x14] sm:$0xf]
  %v43 = vld [vmem:[%s36 + $0x18] sm:$0xf]
  %v44 = vld [vmem:[%s36 + $0x1c] sm:$0xf]
  %v45 = vld [vmem:[%s36 + $0x20] sm:$0xf]
  %v46 = vld [vmem:[%s36 + $0x24] sm:$0xf]
  %v47 = vld [vmem:[%s36 + $0x28] sm:$0xf]
  %v48 = vld [vmem:[%s36 + $0x2c] sm:$0xf]
  %v49 = vld [vmem:[%s36 + $0x30] sm:$0xf]
  %v50 = vld [vmem:[%s36 + $0x34] sm:$0xf]
  %v51 = vld [vmem:[%s36 + $0x38] sm:$0xf]
  %v52 = vld [vmem:[%s36 + $0x3c] sm:$0xf]
  %v53 = vld [vmem:[#allocation2] sm:$0xff]
  %v54 = vld [vmem:[#allocation2 + $0x8] sm:$0xff]
  %v55 = vld [vmem:[#allocation2 + $0x10] sm:$0xff]
  %v56 = vld [vmem:[#allocation2 + $0x18] sm:$0xff]
  %v57 = vld [vmem:[#allocation2 + $0x20] sm:$0xff]
  %v58 = vld [vmem:[#allocation2 + $0x28] sm:$0xff]
  %v59 = vld [vmem:[#allocation2 + $0x30] sm:$0xff]
  %v60 = vld [vmem:[#allocation2 + $0x38] sm:$0xff]
  %v61 = vld [vmem:[#allocation2 + $0x40] sm:$0xff]
  %v62 = vld [vmem:[#allocation2 + $0x48] sm:$0xff]
  %v63 = vld [vmem:[#allocation2 + $0x50] sm:$0xff]
  %v64 = vld [vmem:[#allocation2 + $0x58] sm:$0xff]
  %v65 = vld [vmem:[#allocation2 + $0x60] sm:$0xff]
  %v66 = vld [vmem:[#allocation2 + $0x68] sm:$0xff]
  %v67 = vld [vmem:[#allocation2 + $0x70] sm:$0xff]
  %v68 = vld [vmem:[#allocation2 + $0x78] sm:$0xff]
  %v69 = vld [vmem:[%s0] sm:$0xf]
  %v70 = vld [vmem:[%s0 + $0x4] sm:$0xf]
  %v71 = vld [vmem:[%s0 + $0x8] sm:$0xf]
  %v72 = vld [vmem:[%s0 + $0xc] sm:$0xf]
  %v73 = vld [vmem:[%s0 + $0x10] sm:$0xf]
  %v74 = vld [vmem:[%s0 + $0x14] sm:$0xf]
  %v75 = vld [vmem:[%s0 + $0x18] sm:$0xf]
  %v76 = vld [vmem:[%s0 + $0x1c] sm:$0xf]
  %v77 = vld [vmem:[%s0 + $0x20] sm:$0xf]
  %v78 = vld [vmem:[%s0 + $0x24] sm:$0xf]
  %v79 = vld [vmem:[%s0 + $0x28] sm:$0xf]
  %v80 = vld [vmem:[%s0 + $0x2c] sm:$0xf]
  %v81 = vld [vmem:[%s0 + $0x30] sm:$0xf]
  %v82 = vld [vmem:[%s0 + $0x34] sm:$0xf]
  %v83 = vld [vmem:[%s0 + $0x38] sm:$0xf]
  %v84 = vld [vmem:[%s0 + $0x3c] sm:$0xf]
  %v101 = vunpack.c.l.b16 %v69
  %v102 = vunpack.c.l.b16 %v70
  %v103 = vunpack.c.l.b16 %v71
  %v104 = vunpack.c.l.b16 %v72
  %v105 = vunpack.c.l.b16 %v73
  %v106 = vunpack.c.l.b16 %v74
  %v107 = vunpack.c.l.b16 %v75
  %v108 = vunpack.c.l.b16 %v76
  %v109 = vunpack.c.l.b16 %v77
  %v110 = vunpack.c.l.b16 %v78
  %v111 = vunpack.c.l.b16 %v79
  %v112 = vunpack.c.l.b16 %v80
  %v113 = vunpack.c.l.b16 %v81
  %v114 = vunpack.c.l.b16 %v82
  %v115 = vunpack.c.l.b16 %v83
  %v116 = vunpack.c.l.b16 %v84
  %v117 = vpack.c.b16 %v102, %v101
  %v118 = vpack.c.b16 %v104, %v103
  %v119 = vpack.c.b16 %v106, %v105
  %v120 = vpack.c.b16 %v108, %v107
  %v121 = vpack.c.b16 %v110, %v109
  %v122 = vpack.c.b16 %v112, %v111
  %v123 = vpack.c.b16 %v114, %v113
  %v124 = vpack.c.b16 %v116, %v115
  %v149 = vunpack.c.l.b16 %v37
  %v150 = vunpack.c.l.b16 %v38
  %v151 = vunpack.c.l.b16 %v39
  %v152 = vunpack.c.l.b16 %v40
  %v153 = vunpack.c.l.b16 %v41
  %v154 = vunpack.c.l.b16 %v42
  %v155 = vunpack.c.l.b16 %v43
  %v156 = vunpack.c.l.b16 %v44
  %v157 = vunpack.c.l.b16 %v45
  %v158 = vunpack.c.l.b16 %v46
  %v159 = vunpack.c.l.b16 %v47
  %v160 = vunpack.c.l.b16 %v48
  %v161 = vunpack.c.l.b16 %v49
  %v162 = vunpack.c.l.b16 %v50
  %v163 = vunpack.c.l.b16 %v51
  %v164 = vunpack.c.l.b16 %v52
  %v165 = vpack.c.b16 %v150, %v149
  %v166 = vpack.c.b16 %v152, %v151
  %v167 = vpack.c.b16 %v154, %v153
  %v168 = vpack.c.b16 %v156, %v155
  %v169 = vpack.c.b16 %v158, %v157
  %v170 = vpack.c.b16 %v160, %v159
  %v171 = vpack.c.b16 %v162, %v161
  %v172 = vpack.c.b16 %v164, %v163
  %181 = vmatprep.subr.bf16.mxu0 0
  %182 = vmatpush1.bf16.msra.mxu0 %v165
  %183 = vmatprep.subr.bf16.mxu0 0
  %184 = vmatpush1.bf16.msra.mxu0 %v166
  %185 = vmatprep.subr.bf16.mxu0 0
  %186 = vmatpush1.bf16.msra.mxu0 %v167
  %187 = vmatprep.subr.bf16.mxu0 0
  %188 = vmatpush1.bf16.msra.mxu0 %v168
  %189 = vmatprep.subr.bf16.mxu0 0
  %190 = vmatpush1.bf16.msra.mxu0 %v169
  %191 = vmatprep.subr.bf16.mxu0 0
  %192 = vmatpush1.bf16.msra.mxu0 %v170
  %193 = vmatprep.subr.bf16.mxu0 0
  %194 = vmatpush1.bf16.msra.mxu0 %v171
  %195 = vmatprep.subr.bf16.mxu0 0
  %196 = vmatpush1.bf16.msra.mxu0 %v172
  %197 = vmatprep.subr.bf16.mxu0 0
  %198 = vmatpush1.bf16.msra.mxu0 0
  %199 = vmatprep.subr.bf16.mxu0 0
  %200 = vmatpush1.bf16.msra.mxu0 0
  %201 = vmatprep.subr.bf16.mxu0 0
  %202 = vmatpush1.bf16.msra.mxu0 0
  %203 = vmatprep.subr.bf16.mxu0 0
  %204 = vmatpush1.bf16.msra.mxu0 0
  %205 = vmatprep.subr.bf16.mxu0 0
  %206 = vmatpush1.bf16.msra.mxu0 0
  %207 = vmatprep.subr.bf16.mxu0 0
  %208 = vmatpush1.bf16.msra.mxu0 0
  %209 = vmatprep.subr.bf16.mxu0 0
  %210 = vmatpush1.bf16.msra.mxu0 0
  %211 = vmatprep.subr.bf16.mxu0 0
  %212 = vmatpush1.bf16.msra.mxu0 0
  %213 = vmatprep.mubr.bf16.mxu0 0
  %214 = vmatmul.mubr.bf16.gmra.mrb[0].mxu0 %v117
  %v215 = vpop.f32.mrb[0].mxu0
  %v216 = vadd.f32 0.0, %v215
  %v217 = vpop.f32.mrb[0].mxu0
  %v218 = vpop.f32.mrb[0].mxu0
  %v219 = vadd.f32 0.0, %v218
  %v220 = vpop.f32.mrb[0].mxu0
  %221 = vmatprep.mubr.bf16.mxu0 0
  %222 = vmatmul.mubr.bf16.gmra.mrb[0].mxu0 %v118
  %v223 = vpop.f32.mrb[0].mxu0
  %v224 = vadd.f32 0.0, %v223
  %v225 = vpop.f32.mrb[0].mxu0
  %v226 = vpop.f32.mrb[0].mxu0
  %v227 = vadd.f32 0.0, %v226
  %v228 = vpop.f32.mrb[0].mxu0
  %229 = vmatprep.mubr.bf16.mxu0 0
  %230 = vmatmul.mubr.bf16.gmra.mrb[0].mxu0 %v119
  %v231 = vpop.f32.mrb[0].mxu0
  %v232 = vadd.f32 0.0, %v231
  %v233 = vpop.f32.mrb[0].mxu0
  %v234 = vpop.f32.mrb[0].mxu0
  %v235 = vadd.f32 0.0, %v234
  %v236 = vpop.f32.mrb[0].mxu0
  %237 = vmatprep.mubr.bf16.mxu0 0
  %238 = vmatmul.mubr.bf16.gmra.mrb[0].mxu0 %v120
  %v239 = vpop.f32.mrb[0].mxu0
  %v240 = vadd.f32 0.0, %v239
  %v241 = vpop.f32.mrb[0].mxu0
  %v242 = vpop.f32.mrb[0].mxu0
  %v243 = vadd.f32 0.0, %v242
  %v244 = vpop.f32.mrb[0].mxu0
  %245 = vmatprep.mubr.bf16.mxu0 0
  %246 = vmatmul.mubr.bf16.gmra.mrb[0].mxu0 %v121
  %v247 = vpop.f32.mrb[0].mxu0
  %v248 = vadd.f32 0.0, %v247
  %v249 = vpop.f32.mrb[0].mxu0
  %v250 = vpop.f32.mrb[0].mxu0
  %v251 = vadd.f32 0.0, %v250
  %v252 = vpop.f32.mrb[0].mxu0
  %253 = vmatprep.mubr.bf16.mxu0 0
  %254 = vmatmul.mubr.bf16.gmra.mrb[0].mxu0 %v122
  %v255 = vpop.f32.mrb[0].mxu0
  %v256 = vadd.f32 0.0, %v255
  %v257 = vpop.f32.mrb[0].mxu0
  %v258 = vpop.f32.mrb[0].mxu0
  %v259 = vadd.f32 0.0, %v258
  %v260 = vpop.f32.mrb[0].mxu0
  %261 = vmatprep.mubr.bf16.mxu0 0
  %262 = vmatmul.mubr.bf16.gmra.mrb[0].mxu0 %v123
  %v263 = vpop.f32.mrb[0].mxu0
  %v264 = vadd.f32 0.0, %v263
  %v265 = vpop.f32.mrb[0].mxu0
  %v266 = vpop.f32.mrb[0].mxu0
  %v267 = vadd.f32 0.0, %v266
  %v268 = vpop.f32.mrb[0].mxu0
  %269 = vmatprep.mubr.bf16.mxu0 0
  %270 = vmatmul.mubr.bf16.gmra.mrb[0].mxu0 %v124
  %v271 = vpop.f32.mrb[0].mxu0
  %v272 = vadd.f32 0.0, %v271
  %v273 = vpop.f32.mrb[0].mxu0
  %v274 = vpop.f32.mrb[0].mxu0
  %v275 = vadd.f32 0.0, %v274
  %v276 = vpop.f32.mrb[0].mxu0
  %277 = vdwg.mxu0
  %v278 = vadd.f32 %v53, %v216
  %v279 = vadd.f32 %v54, %v219
  %v280 = vadd.f32 %v55, %v224
  %v281 = vadd.f32 %v56, %v227
  %v282 = vadd.f32 %v57, %v232
  %v283 = vadd.f32 %v58, %v235
  %v284 = vadd.f32 %v59, %v240
  %v285 = vadd.f32 %v60, %v243
  %v286 = vadd.f32 %v61, %v248
  %v287 = vadd.f32 %v62, %v251
  %v288 = vadd.f32 %v63, %v256
  %v289 = vadd.f32 %v64, %v259
  %v290 = vadd.f32 %v65, %v264
  %v291 = vadd.f32 %v66, %v267
  %v292 = vadd.f32 %v67, %v272
  %v293 = vadd.f32 %v68, %v275
  %294 = vst [vmem:[#allocation2] sm:$0xff] %v278
  %295 = vst [vmem:[#allocation2 + $0x8] sm:$0xff] %v279
  %296 = vst [vmem:[#allocation2 + $0x10] sm:$0xff] %v280
  %297 = vst [vmem:[#allocation2 + $0x18] sm:$0xff] %v281
  %298 = vst [vmem:[#allocation2 + $0x20] sm:$0xff] %v282
  %299 = vst [vmem:[#allocation2 + $0x28] sm:$0xff] %v283
  %300 = vst [vmem:[#allocation2 + $0x30] sm:$0xff] %v284
  %301 = vst [vmem:[#allocation2 + $0x38] sm:$0xff] %v285
  %302 = vst [vmem:[#allocation2 + $0x40] sm:$0xff] %v286
  %303 = vst [vmem:[#allocation2 + $0x48] sm:$0xff] %v287
  %304 = vst [vmem:[#allocation2 + $0x50] sm:$0xff] %v288
  %305 = vst [vmem:[#allocation2 + $0x58] sm:$0xff] %v289
  %306 = vst [vmem:[#allocation2 + $0x60] sm:$0xff] %v290
  %307 = vst [vmem:[#allocation2 + $0x68] sm:$0xff] %v291
  %308 = vst [vmem:[#allocation2 + $0x70] sm:$0xff] %v292
  %309 = vst [vmem:[#allocation2 + $0x78] sm:$0xff] %v293
  // Predicated region
  $region14: #{gcn_forward.4} parent=0 // pred_check
    %p310 = pneg %p12
  $region15: #{gcn_forward.4} parent=0 // pred_check_branch
    %312 = sbr.rel (%p310) target = $region17
  $region16: #{gcn_forward.4} parent=0 // pred_region
    %v313 = vld [vmem:[#allocation2] sm:$0xff]
    %v314 = vld [vmem:[#allocation2 + $0x8] sm:$0xff]
    %v315 = vld [vmem:[#allocation2 + $0x10] sm:$0xff]
    %v316 = vld [vmem:[#allocation2 + $0x18] sm:$0xff]
    %v317 = vld [vmem:[#allocation2 + $0x20] sm:$0xff]
    %v318 = vld [vmem:[#allocation2 + $0x28] sm:$0xff]
    %v319 = vld [vmem:[#allocation2 + $0x30] sm:$0xff]
    %v320 = vld [vmem:[#allocation2 + $0x38] sm:$0xff]
    %v321 = vld [vmem:[#allocation2 + $0x40] sm:$0xff]
    %v322 = vld [vmem:[#allocation2 + $0x48] sm:$0xff]
    %v323 = vld [vmem:[#allocation2 + $0x50] sm:$0xff]
    %v324 = vld [vmem:[#allocation2 + $0x58] sm:$0xff]
    %v325 = vld [vmem:[#allocation2 + $0x60] sm:$0xff]
    %v326 = vld [vmem:[#allocation2 + $0x68] sm:$0xff]
    %v327 = vld [vmem:[#allocation2 + $0x70] sm:$0xff]
    %v328 = vld [vmem:[#allocation2 + $0x78] sm:$0xff]
    %v329 = vpack.c.bf16 %v314, %v313
    %v330 = vpack.c.bf16 %v316, %v315
    %v331 = vpack.c.bf16 %v318, %v317
    %v332 = vpack.c.bf16 %v320, %v319
    %v333 = vpack.c.bf16 %v322, %v321
    %v334 = vpack.c.bf16 %v324, %v323
    %v335 = vpack.c.bf16 %v326, %v325
    %v336 = vpack.c.bf16 %v328, %v327
    %v345 = vunpack.c.l.b16 %v329
    %v346 = vunpack.c.h.b16 %v329
    %v347 = vunpack.c.l.b16 %v330
    %v348 = vunpack.c.h.b16 %v330
    %v349 = vunpack.c.l.b16 %v331
    %v350 = vunpack.c.h.b16 %v331
    %v351 = vunpack.c.l.b16 %v332
    %v352 = vunpack.c.h.b16 %v332
    %v353 = vunpack.c.l.b16 %v333
    %v354 = vunpack.c.h.b16 %v333
    %v355 = vunpack.c.l.b16 %v334
    %v356 = vunpack.c.h.b16 %v334
    %v357 = vunpack.c.l.b16 %v335
    %v358 = vunpack.c.h.b16 %v335
    %v359 = vunpack.c.l.b16 %v336
    %v360 = vunpack.c.h.b16 %v336
    %v361 = vpack.c.b16 %v345, %v345
    %v362 = vpack.c.b16 %v346, %v346
    %v363 = vpack.c.b16 %v347, %v347
    %v364 = vpack.c.b16 %v348, %v348
    %v365 = vpack.c.b16 %v349, %v349
    %v366 = vpack.c.b16 %v350, %v350
    %v367 = vpack.c.b16 %v351, %v351
    %v368 = vpack.c.b16 %v352, %v352
    %v369 = vpack.c.b16 %v353, %v353
    %v370 = vpack.c.b16 %v354, %v354
    %v371 = vpack.c.b16 %v355, %v355
    %v372 = vpack.c.b16 %v356, %v356
    %v373 = vpack.c.b16 %v357, %v357
    %v374 = vpack.c.b16 %v358, %v358
    %v375 = vpack.c.b16 %v359, %v359
    %v376 = vpack.c.b16 %v360, %v360
    %393 = vst [vmem:[%s2] sm:$0xf] %v361
    %394 = vst [vmem:[%s2 + $0x4] sm:$0xf] %v362
    %395 = vst [vmem:[%s2 + $0x8] sm:$0xf] %v363
    %396 = vst [vmem:[%s2 + $0xc] sm:$0xf] %v364
    %397 = vst [vmem:[%s2 + $0x10] sm:$0xf] %v365
    %398 = vst [vmem:[%s2 + $0x14] sm:$0xf] %v366
    %399 = vst [vmem:[%s2 + $0x18] sm:$0xf] %v367
    %400 = vst [vmem:[%s2 + $0x1c] sm:$0xf] %v368
    %401 = vst [vmem:[%s2 + $0x20] sm:$0xf] %v369
    %402 = vst [vmem:[%s2 + $0x24] sm:$0xf] %v370
    %403 = vst [vmem:[%s2 + $0x28] sm:$0xf] %v371
    %404 = vst [vmem:[%s2 + $0x2c] sm:$0xf] %v372
    %405 = vst [vmem:[%s2 + $0x30] sm:$0xf] %v373
    %406 = vst [vmem:[%s2 + $0x34] sm:$0xf] %v374
    %407 = vst [vmem:[%s2 + $0x38] sm:$0xf] %v375
    %408 = vst [vmem:[%s2 + $0x3c] sm:$0xf] %v376
  $region17: #{gcn_forward.4} parent=0 // pred_fallthru
    _
  // Predicated region
  $region18: #{gcn_forward.4} parent=0 // pred_check
    _
  $region19: #{gcn_forward.4} parent=0 // pred_check_branch
    %410 = sbr.rel (0) target = $region21
  $region20: #{gcn_forward.4} parent=0 // pred_region
    _
  $region21: #{gcn_forward.4} parent=0 // pred_fallthru
    _
  // Predicated region
  $region22: #{gcn_forward.4} parent=0 // pred_check
    _
  $region23: #{gcn_forward.4} parent=0 // pred_check_branch
    %412 = sbr.rel (0) target = $region25
  $region24: #{gcn_forward.4} parent=0 // pred_region
    _
  $region25: #{gcn_forward.4} parent=0 // pred_fallthru
    _

</llo_original>
